<compile_context>
chip_gen: v7x
topology: tpu7x:2x2x1
jax: 0.10.0
libtpu: 0.0.40
codegen_flags: <defaults>
</compile_context>

<pallas_src>
import functools

import jax
import jax.numpy as jnp
from jax.experimental import pallas as pl
from jax.experimental.pallas import tpu as pltpu


LANE = 128     # TPU lane width (last dim)
SUBLANE = 8    # TPU sublane width (second-to-last dim)


def _round_up(n, m):
    return ((n + m - 1) // m) * m


def _pad2d(a, rows, cols):
    return jnp.pad(a, ((0, rows - a.shape[0]), (0, cols - a.shape[1])))


def _default_bf16_silu():
    """bf16 elementwise SiLU is a win on v6e/v7x (bf16 VPU/EUP); keep f32 on v5e."""
    try:
        kind = jax.devices()[0].device_kind.lower()
    except Exception:
        return True
    return "v5" not in kind


# ---------------------------------------------------------------------------
# Pallas kernels: fused split-weight MLP  (matmuls -> +bias -> SiLU -> matmul)
# ---------------------------------------------------------------------------
def _vf_mlp_scalar_t_kernel(x_ref, cs_ref, w1x_ref, w1c_ref, b1_ref,
                            w2_ref, b2_ref, o_ref, *, bf16_silu):
    # bf16 operands, f32 accumulation on the MXU.  b1_ref already contains the
    # (constant-per-call) time-embedding contribution.
    z = jnp.dot(x_ref[...], w1x_ref[...], preferred_element_type=jnp.float32)
    z = z + jnp.dot(cs_ref[...], w1c_ref[...], preferred_element_type=jnp.float32)
    z = z + b1_ref[...]                            # (1, Hp) f32 effective bias
    if bf16_silu:
        zb = z.astype(jnp.bfloat16)
        a = zb * jax.nn.sigmoid(zb)                # SiLU in bf16 (v6e/v7x)
    else:
        a = (z * jax.nn.sigmoid(z)).astype(jnp.bfloat16)   # f32 SiLU (v5e)
    o = jnp.dot(a, w2_ref[...], preferred_element_type=jnp.float32)
    o = o + b2_ref[...]                            # (1, D) — un-padded output
    o_ref[...] = o.astype(o_ref.dtype)


def _vf_mlp_vec_t_kernel(x_ref, t_ref, cs_ref, freqs_ref, w1x_ref,
                         w1t_sin_ref, w1t_cos_ref, w1c_ref, b1_ref,
                         w2_ref, b2_ref, o_ref, *, bf16_silu):
    # General per-row-t path.  Time embedding is computed in-kernel:
    #   args = t * freqs ; temb = [sin(args) | cos(args)]
    # and its two halves are dotted with the matching row-blocks of W1_t,
    # which is identical to concat(temb) @ W1_t but avoids any lane concat.
    z = jnp.dot(x_ref[...], w1x_ref[...], preferred_element_type=jnp.float32)
    args = t_ref[...] * freqs_ref[...]             # (tb,1)*(1,half) -> (tb,half)
    z = z + jnp.dot(jnp.sin(args).astype(jnp.bfloat16), w1t_sin_ref[...],
                    preferred_element_type=jnp.float32)
    z = z + jnp.dot(jnp.cos(args).astype(jnp.bfloat16), w1t_cos_ref[...],
                    preferred_element_type=jnp.float32)
    z = z + jnp.dot(cs_ref[...], w1c_ref[...], preferred_element_type=jnp.float32)
    z = z + b1_ref[...]
    if bf16_silu:
        zb = z.astype(jnp.bfloat16)
        a = zb * jax.nn.sigmoid(zb)
    else:
        a = (z * jax.nn.sigmoid(z)).astype(jnp.bfloat16)
    o = jnp.dot(a, w2_ref[...], preferred_element_type=jnp.float32)
    o = o + b2_ref[...]
    o_ref[...] = o.astype(o_ref.dtype)


def _call_fused_mlp(kernel, batch_arrays, resident_arrays, d_out,
                    out_dtype, *, tile_b=2048):
    """Tile `batch_arrays` along the batch axis (ragged last block handled by
    Pallas), keep `resident_arrays` (weights / biases) whole in VMEM, run the
    fused MLP kernel, and return the exact (B, d_out) result — no padding, no
    post-kernel slices."""
    B = batch_arrays[0].shape[0]
    tb = min(tile_b, _round_up(B, SUBLANE))        # keep block rows 8-aligned
    grid = (pl.cdiv(B, tb),)

    in_specs = []
    for a in batch_arrays:
        k = a.shape[1]
        in_specs.append(pl.BlockSpec((tb, k), lambda i: (i, 0)))
    for a in resident_arrays:
        r, c = a.shape
        # Constant block index -> weights stay resident in VMEM across steps.
        in_specs.append(pl.BlockSpec((r, c), lambda i: (0, 0)))

    out = pl.pallas_call(
        kernel,
        out_shape=jax.ShapeDtypeStruct((B, d_out), out_dtype),
        grid_spec=pltpu.PrefetchScalarGridSpec(
            num_scalar_prefetch=0,
            grid=grid,
            in_specs=in_specs,
            out_specs=pl.BlockSpec((tb, d_out), lambda i: (i, 0)),
        ),
        compiler_params=pltpu.CompilerParams(
            dimension_semantics=("parallel",),     # batch tiles -> megacore (v7x)
        ),
    )(*batch_arrays, *resident_arrays)
    return out


# ---------------------------------------------------------------------------
# Glue (time embedding, scalar-t bias fold) in plain JAX; hot path in Pallas.
# ---------------------------------------------------------------------------
def sinusoidal_time_embed(t, dim):
    """t: [B] in [0,1] -> [B, dim] sinusoidal embedding (dim must be even)."""
    assert dim % 2 == 0, "t_emb_dim must be even"
    half = dim // 2
    freqs = jnp.exp(
        -jnp.log(10000.0) * jnp.arange(half, dtype=jnp.float32) / max(half - 1, 1)
    )
    args = t[:, None].astype(jnp.float32) * freqs[None, :]
    return jnp.concatenate([jnp.sin(args), jnp.cos(args)], axis=-1)


class CondCondVF:
    """Conditional vector field: forward(t, x, cs) = net(t, x, cs)."""

    def __init__(self, x_dim, cond_dim, t_emb_dim=16, hidden=64,
                 key=None, tile_b=2048, bf16_silu=None):
        if key is None:
            key = jax.random.PRNGKey(0)
        k1, k2, k3, k4 = jax.random.split(key, 4)
        d_in = x_dim + t_emb_dim + cond_dim

        # f32 "master" parameters (deterministic synthetic; also used by the
        # pure-f32 reference).
        self.w1 = (jax.random.normal(k1, (d_in, hidden)) / d_in ** 0.5).astype(jnp.float32)
        self.b1 = (jax.random.normal(k2, (1, hidden)) * 0.01).astype(jnp.float32)
        self.w2 = (jax.random.normal(k3, (hidden, x_dim)) / hidden ** 0.5).astype(jnp.float32)
        self.b2 = (jax.random.normal(k4, (1, x_dim)) * 0.01).astype(jnp.float32)

        self.x_dim = x_dim
        self.cond_dim = cond_dim
        self.t_emb_dim = t_emb_dim
        self.hidden = hidden
        self.tile_b = tile_b
        self.bf16_silu = _default_bf16_silu() if bf16_silu is None else bf16_silu

        # Kernel-side parameters: W1 split by input block (x | t_emb | cs),
        # hidden lane-padded to 128 and stored bf16 (native MXU operand dtype).
        # Padded W1 columns / b1 entries are zero -> SiLU(0)=0, and padded W2
        # rows are zero, so the padding contributes nothing to the output.
        # W2 / b2 are NOT lane-padded on the output dim (un-padded HBM write).
        hp = _round_up(hidden, LANE)
        self.h_pad = hp
        half = t_emb_dim // 2
        self.t_emb_half = half
        w1x = self.w1[:x_dim]
        w1t = self.w1[x_dim:x_dim + t_emb_dim]
        w1c = self.w1[x_dim + t_emb_dim:]
        self.w1x_p = _pad2d(w1x, x_dim, hp).astype(jnp.bfloat16)
        self.w1t_p = _pad2d(w1t, t_emb_dim, hp).astype(jnp.bfloat16)
        self.w1t_sin_p = self.w1t_p[:half]
        self.w1t_cos_p = self.w1t_p[half:]
        self.w1c_p = _pad2d(w1c, cond_dim, hp).astype(jnp.bfloat16)
        self.b1_p = _pad2d(self.b1, 1, hp).astype(jnp.float32)
        self.w2_p = _pad2d(self.w2, hp, x_dim).astype(jnp.bfloat16)
        self.b2_p = self.b2.astype(jnp.float32)
        # Resident frequency row for in-kernel sinusoidal embedding.
        self.freqs = jnp.exp(
            -jnp.log(10000.0) * jnp.arange(half, dtype=jnp.float32) / max(half - 1, 1)
        ).reshape(1, half)

    # -- general path: per-row t (matches nn.Module.forward signature) -------
    def forward(self, t, x, cs):
        """t: [B], x: [B, D], cs: [B, C]  ->  [B, D]."""
        B = x.shape[0]
        t_col = jnp.asarray(t, jnp.float32).reshape(B, 1)
        return _call_fused_mlp(
            functools.partial(_vf_mlp_vec_t_kernel, bf16_silu=self.bf16_silu),
            [x.astype(jnp.bfloat16), t_col, cs.astype(jnp.bfloat16)],
            [self.freqs, self.w1x_p, self.w1t_sin_p, self.w1t_cos_p,
             self.w1c_p, self.b1_p, self.w2_p, self.b2_p],
            self.x_dim, x.dtype, tile_b=self.tile_b)

    def __call__(self, t, x, cs):
        return self.forward(t, x, cs)

    # -- scalar-t fast path: PyTorch wrapper() semantics (t * ones(len(x))) --
    def wrapper(self, t, x, cs):
        """t: scalar in [0,1], broadcast over the batch.  Since every row
        shares t, the time-embedding contribution t_emb @ W1_t is a constant
        vector folded into the first-layer bias once per call."""
        t_row = jnp.asarray(t, jnp.float32).reshape(1)
        temb = sinusoidal_time_embed(t_row, self.t_emb_dim).astype(jnp.bfloat16)
        b1_eff = self.b1_p + jnp.dot(temb, self.w1t_p,
                                     preferred_element_type=jnp.float32)
        return _call_fused_mlp(
            functools.partial(_vf_mlp_scalar_t_kernel, bf16_silu=self.bf16_silu),
            [x.astype(jnp.bfloat16), cs.astype(jnp.bfloat16)],
            [self.w1x_p, self.w1c_p, b1_eff, self.w2_p, self.b2_p],
            self.x_dim, x.dtype, tile_b=self.tile_b)

    # TODO(synk): decode/encode use torchdyn-style `odeint`; ODE integration is
    # host-side control flow outside the kernel scope and is not implemented.


# ---------------------------------------------------------------------------
# References for correctness checking.
# ---------------------------------------------------------------------------
def _ref_forward_bf16(model, t_vec, x, cs):
    """Pure-JAX mirror of the kernel arithmetic (bf16 operands, f32 acc)."""
    temb = sinusoidal_time_embed(t_vec, model.t_emb_dim).astype(jnp.bfloat16)
    xb = x.astype(jnp.bfloat16)
    cb = cs.astype(jnp.bfloat16)
    z = (jnp.dot(xb, model.w1x_p, preferred_element_type=jnp.float32)
         + jnp.dot(temb, model.w1t_p, preferred_element_type=jnp.float32)
         + jnp.dot(cb, model.w1c_p, preferred_element_type=jnp.float32)
         + model.b1_p)
    if model.bf16_silu:
        zb = z.astype(jnp.bfloat16)
        a = zb * jax.nn.sigmoid(zb)
    else:
        a = (z * jax.nn.sigmoid(z)).astype(jnp.bfloat16)
    out = (jnp.dot(a, model.w2_p, preferred_element_type=jnp.float32) + model.b2_p)
    return out.astype(x.dtype)


def _ref_forward_f32(model, t_vec, x, cs):
    """Original full-precision semantics (concat + f32 matmuls)."""
    temb = sinusoidal_time_embed(t_vec, model.t_emb_dim)
    h = jnp.concatenate([x, temb.astype(x.dtype), cs.astype(x.dtype)], axis=-1)
    z = h.astype(jnp.float32) @ model.w1 + model.b1
    a = z * jax.nn.sigmoid(z)
    return (a @ model.w2 + model.b2).astype(x.dtype)


if __name__ == "__main__":
    key = jax.random.PRNGKey(0)
    k_x, k_c, k_t, k_p = jax.random.split(key, 4)

    B, D, C = 8, 32, 16
    x = jax.random.normal(k_x, (B, D), dtype=jnp.float32)
    cs = jax.random.normal(k_c, (B, C), dtype=jnp.float32)
    t_scalar = jnp.float32(0.37)
    t_vec = t_scalar * jnp.ones((B,), dtype=jnp.float32)

    model = CondCondVF(x_dim=D, cond_dim=C, t_emb_dim=16, hidden=64, key=k_p)

    # Scalar-t fast path (PyTorch wrapper semantics: t * ones(len(x))).
    out_w = jax.block_until_ready(model.wrapper(t_scalar, x, cs))
    # General per-row-t path (forward).
    out_f = jax.block_until_ready(model.forward(t_vec, x, cs))

    ref_bf16 = _ref_forward_bf16(model, t_vec, x, cs)
    ref_f32 = _ref_forward_f32(model, t_vec, x, cs)

    assert out_w.shape == (B, D) and out_f.shape == (B, D)
    # Check vs. the bf16-mirrored reference (same arithmetic).
    assert jnp.allclose(out_f, ref_bf16, atol=1e-2, rtol=1e-2), "forward mismatch"
    assert jnp.allclose(out_w, ref_bf16, atol=1e-2, rtol=1e-2), "wrapper mismatch"
    # Loose sanity check vs. the original f32 semantics (bf16 quantization).
    assert jnp.allclose(out_w, ref_f32, atol=1e-1, rtol=1e-1), "f32 semantics drift"

    print("KERNEL_OK")
</pallas_src>

<mosaic_0001>
module attributes {stable_mosaic.version = 11 : i64} {
  func.func @_vf_mlp_scalar_t_kernel(%arg0: i32, %arg1: memref<8x32xbf16, #tpu.memory_space<vmem>>, %arg2: memref<8x16xbf16, #tpu.memory_space<vmem>>, %arg3: memref<32x128xbf16, #tpu.memory_space<vmem>>, %arg4: memref<16x128xbf16, #tpu.memory_space<vmem>>, %arg5: memref<1x128xf32, #tpu.memory_space<vmem>>, %arg6: memref<128x32xbf16, #tpu.memory_space<vmem>>, %arg7: memref<1x32xf32, #tpu.memory_space<vmem>>, %arg8: memref<8x32xf32, #tpu.memory_space<vmem>>) attributes {dimension_semantics = [#tpu.dimension_semantics<parallel>], iteration_bounds = array<i64: 1>, scalar_prefetch = 0 : i64, scratch_operands = 0 : i64, tpu.core_type = #tpu.core_type<tc>, window_params = [{transform_indices = @transform_0, window_bounds = array<i64: 8, 32>}, {transform_indices = @transform_1, window_bounds = array<i64: 8, 16>}, {pipeline_mode = #tpu.pipeline_mode<synchronous>, transform_indices = @transform_2, window_bounds = array<i64: 32, 128>}, {pipeline_mode = #tpu.pipeline_mode<synchronous>, transform_indices = @transform_3, window_bounds = array<i64: 16, 128>}, {pipeline_mode = #tpu.pipeline_mode<synchronous>, transform_indices = @transform_4, window_bounds = array<i64: 1, 128>}, {pipeline_mode = #tpu.pipeline_mode<synchronous>, transform_indices = @transform_5, window_bounds = array<i64: 128, 32>}, {pipeline_mode = #tpu.pipeline_mode<synchronous>, transform_indices = @transform_6, window_bounds = array<i64: 1, 32>}, {transform_indices = @transform_7, window_bounds = array<i64: 8, 32>}]} {
    %c0 = arith.constant 0 : index
    %c0_0 = arith.constant 0 : index
    %0 = vector.load %arg1[%c0, %c0_0] : memref<8x32xbf16, #tpu.memory_space<vmem>>, vector<8x32xbf16>
    %c0_1 = arith.constant 0 : index
    %c0_2 = arith.constant 0 : index
    %1 = vector.load %arg3[%c0_1, %c0_2] : memref<32x128xbf16, #tpu.memory_space<vmem>>, vector<32x128xbf16>
    %cst = arith.constant dense<0.000000e+00> : vector<8x128xf32>
    %2 = tpu.matmul %0, %1, %cst {dimension_numbers = #tpu.dot_dimension_numbers<[1], [0], [0], [1], [0, 0, 1, 1], [], []>} : vector<8x32xbf16>, vector<32x128xbf16>, vector<8x128xf32> -> vector<8x128xf32>
    %c0_3 = arith.constant 0 : index
    %c0_4 = arith.constant 0 : index
    %3 = vector.load %arg2[%c0_3, %c0_4] : memref<8x16xbf16, #tpu.memory_space<vmem>>, vector<8x16xbf16>
    %c0_5 = arith.constant 0 : index
    %c0_6 = arith.constant 0 : index
    %4 = vector.load %arg4[%c0_5, %c0_6] : memref<16x128xbf16, #tpu.memory_space<vmem>>, vector<16x128xbf16>
    %cst_7 = arith.constant dense<0.000000e+00> : vector<8x128xf32>
    %5 = tpu.matmul %3, %4, %cst_7 {dimension_numbers = #tpu.dot_dimension_numbers<[1], [0], [0], [1], [0, 0, 1, 1], [], []>} : vector<8x16xbf16>, vector<16x128xbf16>, vector<8x128xf32> -> vector<8x128xf32>
    %6 = arith.addf %2, %5 : vector<8x128xf32>
    %c0_8 = arith.constant 0 : index
    %c0_9 = arith.constant 0 : index
    %7 = vector.load %arg5[%c0_8, %c0_9] : memref<1x128xf32, #tpu.memory_space<vmem>>, vector<1x128xf32>
    %8 = vector.broadcast %7 : vector<1x128xf32> to vector<8x128xf32>
    %9 = arith.addf %6, %8 : vector<8x128xf32>
    %10 = arith.truncf %9 : vector<8x128xf32> to vector<8x128xbf16>
    %11 = arith.negf %10 : vector<8x128xbf16>
    %12 = math.exp %11 : vector<8x128xbf16>
    %cst_10 = arith.constant 1.000000e+00 : bf16
    %13 = vector.broadcast %cst_10 : bf16 to vector<8x128xbf16>
    %14 = arith.addf %13, %12 : vector<8x128xbf16>
    %15 = arith.divf %13, %14 : vector<8x128xbf16>
    %16 = arith.mulf %10, %15 : vector<8x128xbf16>
    %c0_11 = arith.constant 0 : index
    %c0_12 = arith.constant 0 : index
    %17 = vector.load %arg6[%c0_11, %c0_12] : memref<128x32xbf16, #tpu.memory_space<vmem>>, vector<128x32xbf16>
    %cst_13 = arith.constant dense<0.000000e+00> : vector<8x32xf32>
    %18 = tpu.matmul %16, %17, %cst_13 {dimension_numbers = #tpu.dot_dimension_numbers<[1], [0], [0], [1], [0, 0, 1, 1], [], []>} : vector<8x128xbf16>, vector<128x32xbf16>, vector<8x32xf32> -> vector<8x32xf32>
    %c0_14 = arith.constant 0 : index
    %c0_15 = arith.constant 0 : index
    %19 = vector.load %arg7[%c0_14, %c0_15] : memref<1x32xf32, #tpu.memory_space<vmem>>, vector<1x32xf32>
    %20 = vector.broadcast %19 : vector<1x32xf32> to vector<8x32xf32>
    %21 = arith.addf %18, %20 : vector<8x32xf32>
    %c0_16 = arith.constant 0 : index
    %c0_17 = arith.constant 0 : index
    %22 = vector.load %arg8[%c0_16, %c0_17] : memref<8x32xf32, #tpu.memory_space<vmem>>, vector<8x32xf32>
    tpu.vector_store %arg8[%c0_16, %c0_17], %21 {strides = array<i32>} : memref<8x32xf32, #tpu.memory_space<vmem>>, vector<8x32xf32>,
    return
  }
  func.func @transform_0(%arg0: i32) -> (i32, i32) {
    %c0_i32 = arith.constant 0 : i32
    %c0_i32_0 = arith.constant 0 : i32
    return %arg0, %c0_i32 : i32, i32
  }
  func.func @transform_1(%arg0: i32) -> (i32, i32) {
    %c0_i32 = arith.constant 0 : i32
    %c0_i32_0 = arith.constant 0 : i32
    return %arg0, %c0_i32 : i32, i32
  }
  func.func @transform_2(%arg0: i32) -> (i32, i32) {
    %c0_i32 = arith.constant 0 : i32
    %c0_i32_0 = arith.constant 0 : i32
    %c0_i32_1 = arith.constant 0 : i32
    return %c0_i32, %c0_i32_0 : i32, i32
  }
  func.func @transform_3(%arg0: i32) -> (i32, i32) {
    %c0_i32 = arith.constant 0 : i32
    %c0_i32_0 = arith.constant 0 : i32
    %c0_i32_1 = arith.constant 0 : i32
    return %c0_i32, %c0_i32_0 : i32, i32
  }
  func.func @transform_4(%arg0: i32) -> (i32, i32) {
    %c0_i32 = arith.constant 0 : i32
    %c0_i32_0 = arith.constant 0 : i32
    %c0_i32_1 = arith.constant 0 : i32
    return %c0_i32, %c0_i32_0 : i32, i32
  }
  func.func @transform_5(%arg0: i32) -> (i32, i32) {
    %c0_i32 = arith.constant 0 : i32
    %c0_i32_0 = arith.constant 0 : i32
    %c0_i32_1 = arith.constant 0 : i32
    return %c0_i32, %c0_i32_0 : i32, i32
  }
  func.func @transform_6(%arg0: i32) -> (i32, i32) {
    %c0_i32 = arith.constant 0 : i32
    %c0_i32_0 = arith.constant 0 : i32
    %c0_i32_1 = arith.constant 0 : i32
    return %c0_i32, %c0_i32_0 : i32, i32
  }
  func.func @transform_7(%arg0: i32) -> (i32, i32) {
    %c0_i32 = arith.constant 0 : i32
    %c0_i32_0 = arith.constant 0 : i32
    return %arg0, %c0_i32 : i32, i32
  }
}

</mosaic_0001>

<llo_original>
// kernel: tpu_custom_call.1
$region0: #{tpu_custom_call.1}
  #allocation0 [shape = 'u32[]', space=smem, size = 0x4, offset = 0x4, fixed_abs, tag = 'smem constant byte address 0x4 - core index']
  #allocation1 [shape = 'u32[144,128]{1,0:T(1,128)}', space=vmem, size = 0x12000, scoped, tag = 'internal scratch']
  %s0 = inlined_call_operand.vmem [shape: bf16[8,32], index: 0, kind: input, shape index: {}]
  %s1 = inlined_call_operand.vmem [shape: bf16[8,16], index: 1, kind: input, shape index: {}]
  %s2 = inlined_call_operand.vmem [shape: bf16[32,128], index: 2, kind: input, shape index: {}]
  %s3 = inlined_call_operand.vmem [shape: bf16[16,128], index: 3, kind: input, shape index: {}]
  %s4 = inlined_call_operand.vmem [shape: f32[1,128], index: 4, kind: input, shape index: {}]
  %s5 = inlined_call_operand.vmem [shape: bf16[128,32], index: 5, kind: input, shape index: {}]
  %s6 = inlined_call_operand.vmem [shape: f32[1,32], index: 6, kind: input, shape index: {}]
  %s7 = inlined_call_operand.hbm [shape: f32[8,32], index: 7, kind: output, shape index: {}]
  %s8 = sld [smem:[#allocation0]]
  $region38: #{tpu_custom_call.1} parent=0
    _
  %s10 = ssub.s32 1, %s8
  %s11 = scalar_select 0, %s10, %s8
  $region1: #{tpu_custom_call.1} parent=0
    #allocation2 [shape = 'u8[4096]{0}', space=vmem, size = 0x1000, scoped, tag = 'output window, operand 0, single buffered']
    #allocation3 [shape = 's32[1]{0}', space=sflag, size = 0x4, scoped, tag = 'scoped memory for tpu_custom_call.1']
    %12 = vsyncpa [#allocation3], 0
    // Predicated region
    $region2: #{tpu_custom_call.1} parent=1 // pred_check
      _
    $region3: #{tpu_custom_call.1} parent=1 // pred_check_branch
      %14 = sbr.rel (0) target = $region5
    $region4: #{tpu_custom_call.1} parent=1 // pred_region
      _
    $region5: #{tpu_custom_call.1} parent=1 // pred_fallthru
      _
    // Predicated region
    $region6: #{tpu_custom_call.1} parent=1 // pred_check
      _
    $region7: #{tpu_custom_call.1} parent=1 // pred_check_branch
      %16 = sbr.rel (0) target = $region9
    $region8: #{tpu_custom_call.1} parent=1 // pred_region
      _
    $region9: #{tpu_custom_call.1} parent=1 // pred_fallthru
      _
    // Predicated region
    $region10: #{tpu_custom_call.1} parent=1 // pred_check
      _
    $region11: #{tpu_custom_call.1} parent=1 // pred_check_branch
      %18 = sbr.rel (0) target = $region13
    $region12: #{tpu_custom_call.1} parent=1 // pred_region
      _
    $region13: #{tpu_custom_call.1} parent=1 // pred_fallthru
      _
    // Predicated region
    $region14: #{tpu_custom_call.1} parent=1 // pred_check
      _
    $region15: #{tpu_custom_call.1} parent=1 // pred_check_branch
      %20 = sbr.rel (0) target = $region17
    $region16: #{tpu_custom_call.1} parent=1 // pred_region
      _
    $region17: #{tpu_custom_call.1} parent=1 // pred_fallthru
      _
    // Predicated region
    $region18: #{tpu_custom_call.1} parent=1 // pred_check
      _
    $region19: #{tpu_custom_call.1} parent=1 // pred_check_branch
      %22 = sbr.rel (0) target = $region21
    $region20: #{tpu_custom_call.1} parent=1 // pred_region
      _
    $region21: #{tpu_custom_call.1} parent=1 // pred_fallthru
      _
    // Predicated region
    $region22: #{tpu_custom_call.1} parent=1 // pred_check
      _
    $region23: #{tpu_custom_call.1} parent=1 // pred_check_branch
      %24 = sbr.rel (0) target = $region25
    $region24: #{tpu_custom_call.1} parent=1 // pred_region
      _
    $region25: #{tpu_custom_call.1} parent=1 // pred_fallthru
      _
    // Predicated region
    $region26: #{tpu_custom_call.1} parent=1 // pred_check
      _
    $region27: #{tpu_custom_call.1} parent=1 // pred_check_branch
      %26 = sbr.rel (0) target = $region29
    $region28: #{tpu_custom_call.1} parent=1 // pred_region
      _
    $region29: #{tpu_custom_call.1} parent=1 // pred_fallthru
      _
    %v29 = vld [vmem:[%s0] sm:$0xf]
    %v30 = vld [vmem:[%s2] sm:$0xf]
    %v31 = vld [vmem:[%s2 + $0x4] sm:$0xf]
    %v32 = vld [vmem:[%s2 + $0x8] sm:$0xf]
    %v33 = vld [vmem:[%s2 + $0xc] sm:$0xf]
    %v34 = vld [vmem:[%s1] sm:$0xf]
    %v35 = vld [vmem:[%s3] sm:$0xf]
    %v36 = vld [vmem:[%s3 + $0x4] sm:$0xf]
    %v39 = vunpack.c.l.b16 %v35
    %v40 = vunpack.c.l.b16 %v36
    %v41 = vpack.c.b16 %v40, %v39
    %vm43 = vcmask 130048
    %v45 = vsel %vm43, %v34, 0
    %47 = vmatprep.subr.bf16.mxu0 0
    %48 = vmatpush1.bf16.msra.mxu0 %v41
    %49 = vmatprep.subr.bf16.mxu0 0
    %50 = vmatpush1.bf16.msra.mxu0 0
    %51 = vmatprep.subr.bf16.mxu0 0
    %52 = vmatpush1.bf16.msra.mxu0 0
    %53 = vmatprep.subr.bf16.mxu0 0
    %54 = vmatpush1.bf16.msra.mxu0 0
    %55 = vmatprep.subr.bf16.mxu0 0
    %56 = vmatpush1.bf16.msra.mxu0 0
    %57 = vmatprep.subr.bf16.mxu0 0
    %58 = vmatpush1.bf16.msra.mxu0 0
    %59 = vmatprep.subr.bf16.mxu0 0
    %60 = vmatpush1.bf16.msra.mxu0 0
    %61 = vmatprep.subr.bf16.mxu0 0
    %62 = vmatpush1.bf16.msra.mxu0 0
    %63 = vmatprep.subr.bf16.mxu0 0
    %64 = vmatpush1.bf16.msra.mxu0 0
    %65 = vmatprep.subr.bf16.mxu0 0
    %66 = vmatpush1.bf16.msra.mxu0 0
    %67 = vmatprep.subr.bf16.mxu0 0
    %68 = vmatpush1.bf16.msra.mxu0 0
    %69 = vmatprep.subr.bf16.mxu0 0
    %70 = vmatpush1.bf16.msra.mxu0 0
    %71 = vmatprep.subr.bf16.mxu0 0
    %72 = vmatpush1.bf16.msra.mxu0 0
    %73 = vmatprep.subr.bf16.mxu0 0
    %74 = vmatpush1.bf16.msra.mxu0 0
    %75 = vmatprep.subr.bf16.mxu0 0
    %76 = vmatpush1.bf16.msra.mxu0 0
    %77 = vmatprep.subr.bf16.mxu0 0
    %78 = vmatpush1.bf16.msra.mxu0 0
    %79 = vmatprep.mubr.bf16.mxu0 0
    %80 = vmatmul.mubr.bf16.gmra.mrb[0].mxu0 %v45
    %v81 = vpop.f32.mrb[0].mxu0
    %v82 = vadd.f32 0.0, %v81
    %v83 = vpop.f32.mrb[0].mxu0
    %v84 = vpop.f32.mrb[0].mxu0
    %v85 = vpop.f32.mrb[0].mxu0
    %86 = vdwg.mxu0
    %v91 = vunpack.c.l.b16 %v30
    %v92 = vunpack.c.l.b16 %v31
    %v93 = vunpack.c.l.b16 %v32
    %v94 = vunpack.c.l.b16 %v33
    %v95 = vpack.c.b16 %v92, %v91
    %v96 = vpack.c.b16 %v94, %v93
    %vm99 = vcmask 261120
    %v101 = vsel %vm99, %v29, 0
    %103 = vmatprep.subr.bf16.mxu0 0
    %104 = vmatpush1.bf16.msra.mxu0 %v95
    %105 = vmatprep.subr.bf16.mxu0 0
    %106 = vmatpush1.bf16.msra.mxu0 %v96
    %107 = vmatprep.subr.bf16.mxu0 0
    %108 = vmatpush1.bf16.msra.mxu0 0
    %109 = vmatprep.subr.bf16.mxu0 0
    %110 = vmatpush1.bf16.msra.mxu0 0
    %111 = vmatprep.subr.bf16.mxu0 0
    %112 = vmatpush1.bf16.msra.mxu0 0
    %113 = vmatprep.subr.bf16.mxu0 0
    %114 = vmatpush1.bf16.msra.mxu0 0
    %115 = vmatprep.subr.bf16.mxu0 0
    %116 = vmatpush1.bf16.msra.mxu0 0
    %117 = vmatprep.subr.bf16.mxu0 0
    %118 = vmatpush1.bf16.msra.mxu0 0
    %119 = vmatprep.subr.bf16.mxu0 0
    %120 = vmatpush1.bf16.msra.mxu0 0
    %121 = vmatprep.subr.bf16.mxu0 0
    %122 = vmatpush1.bf16.msra.mxu0 0
    %123 = vmatprep.subr.bf16.mxu0 0
    %124 = vmatpush1.bf16.msra.mxu0 0
    %125 = vmatprep.subr.bf16.mxu0 0
    %126 = vmatpush1.bf16.msra.mxu0 0
    %127 = vmatprep.subr.bf16.mxu0 0
    %128 = vmatpush1.bf16.msra.mxu0 0
    %129 = vmatprep.subr.bf16.mxu0 0
    %130 = vmatpush1.bf16.msra.mxu0 0
    %131 = vmatprep.subr.bf16.mxu0 0
    %132 = vmatpush1.bf16.msra.mxu0 0
    %133 = vmatprep.subr.bf16.mxu0 0
    %134 = vmatpush1.bf16.msra.mxu0 0
    %135 = vmatprep.mubr.bf16.mxu0 0
    %136 = vmatmul.mubr.bf16.gmra.mrb[0].mxu0 %v101
    %v137 = vpop.f32.mrb[0].mxu0
    %v138 = vadd.f32 %v82, %v137
    %v139 = vpop.f32.mrb[0].mxu0
    %v140 = vpop.f32.mrb[0].mxu0
    %v141 = vpop.f32.mrb[0].mxu0
    %142 = vdwg.mxu0
    %v143 = vld [vmem:[%s4] sm:$0x1]
    %v145 = vlaneseq
    %v146 = vshrl.u32 %v145, 7
    %v147 = vsub.s32 0, %v146
    %v148 = vrot.slane %v143, %v147
    %v150 = vadd.f32 %v138, %v148
    %v151 = vpack.c.bf16 %v150, %v150
    %v152 = vxor.u32 %v151, 2147516416
    %v154 = vmul.bf16 %v152, 1069105081
    %v155 = vpow.bf16.pop %v154
    %v156 = vadd.bf16 %v155, 1065369472
    %v157 = vrcp.bf16.pop %v156
    %v158 = vmul.bf16 1065369472, %v157
    %v159 = vmul.bf16 %v151, %v158
    %v160 = vld [vmem:[%s5] sm:$0xf]
    %v161 = vld [vmem:[%s5 + $0x4] sm:$0xf]
    %v162 = vld [vmem:[%s5 + $0x8] sm:$0xf]
    %v163 = vld [vmem:[%s5 + $0xc] sm:$0xf]
    %v164 = vld [vmem:[%s5 + $0x10] sm:$0xf]
    %v165 = vld [vmem:[%s5 + $0x14] sm:$0xf]
    %v166 = vld [vmem:[%s5 + $0x18] sm:$0xf]
    %v167 = vld [vmem:[%s5 + $0x1c] sm:$0xf]
    %v168 = vld [vmem:[%s5 + $0x20] sm:$0xf]
    %v169 = vld [vmem:[%s5 + $0x24] sm:$0xf]
    %v170 = vld [vmem:[%s5 + $0x28] sm:$0xf]
    %v171 = vld [vmem:[%s5 + $0x2c] sm:$0xf]
    %v172 = vld [vmem:[%s5 + $0x30] sm:$0xf]
    %v173 = vld [vmem:[%s5 + $0x34] sm:$0xf]
    %v174 = vld [vmem:[%s5 + $0x38] sm:$0xf]
    %v175 = vld [vmem:[%s5 + $0x3c] sm:$0xf]
    %v176 = vld [vmem:[%s6] sm:$0x1]
    %v178 = vlaneseq
    %v179 = vshrl.u32 %v178, 7
    %v180 = vsub.s32 0, %v179
    %v181 = vrot.slane %v176, %v180
    %v199 = vunpack.c.l.b16 %v160
    %v200 = vunpack.c.l.b16 %v161
    %v201 = vunpack.c.l.b16 %v162
    %v202 = vunpack.c.l.b16 %v163
    %v203 = vunpack.c.l.b16 %v164
    %v204 = vunpack.c.l.b16 %v165
    %v205 = vunpack.c.l.b16 %v166
    %v206 = vunpack.c.l.b16 %v167
    %v207 = vunpack.c.l.b16 %v168
    %v208 = vunpack.c.l.b16 %v169
    %v209 = vunpack.c.l.b16 %v170
    %v210 = vunpack.c.l.b16 %v171
    %v211 = vunpack.c.l.b16 %v172
    %v212 = vunpack.c.l.b16 %v173
    %v213 = vunpack.c.l.b16 %v174
    %v214 = vunpack.c.l.b16 %v175
    %v215 = vpack.c.b16 %v200, %v199
    %v216 = vpack.c.b16 %v202, %v201
    %v217 = vpack.c.b16 %v204, %v203
    %v218 = vpack.c.b16 %v206, %v205
    %v219 = vpack.c.b16 %v208, %v207
    %v220 = vpack.c.b16 %v210, %v209
    %v221 = vpack.c.b16 %v212, %v211
    %v222 = vpack.c.b16 %v214, %v213
    %231 = vmatprep.subr.bf16.mxu0 0
    %232 = vmatpush1.bf16.msra.mxu0 %v215
    %233 = vmatprep.subr.bf16.mxu0 0
    %234 = vmatpush1.bf16.msra.mxu0 %v216
    %235 = vmatprep.subr.bf16.mxu0 0
    %236 = vmatpush1.bf16.msra.mxu0 %v217
    %237 = vmatprep.subr.bf16.mxu0 0
    %238 = vmatpush1.bf16.msra.mxu0 %v218
    %239 = vmatprep.subr.bf16.mxu0 0
    %240 = vmatpush1.bf16.msra.mxu0 %v219
    %241 = vmatprep.subr.bf16.mxu0 0
    %242 = vmatpush1.bf16.msra.mxu0 %v220
    %243 = vmatprep.subr.bf16.mxu0 0
    %244 = vmatpush1.bf16.msra.mxu0 %v221
    %245 = vmatprep.subr.bf16.mxu0 0
    %246 = vmatpush1.bf16.msra.mxu0 %v222
    %247 = vmatprep.subr.bf16.mxu0 0
    %248 = vmatpush1.bf16.msra.mxu0 0
    %249 = vmatprep.subr.bf16.mxu0 0
    %250 = vmatpush1.bf16.msra.mxu0 0
    %251 = vmatprep.subr.bf16.mxu0 0
    %252 = vmatpush1.bf16.msra.mxu0 0
    %253 = vmatprep.subr.bf16.mxu0 0
    %254 = vmatpush1.bf16.msra.mxu0 0
    %255 = vmatprep.subr.bf16.mxu0 0
    %256 = vmatpush1.bf16.msra.mxu0 0
    %257 = vmatprep.subr.bf16.mxu0 0
    %258 = vmatpush1.bf16.msra.mxu0 0
    %259 = vmatprep.subr.bf16.mxu0 0
    %260 = vmatpush1.bf16.msra.mxu0 0
    %261 = vmatprep.subr.bf16.mxu0 0
    %262 = vmatpush1.bf16.msra.mxu0 0
    %263 = vmatprep.mubr.bf16.mxu0 0
    %264 = vmatmul.mubr.bf16.gmra.mrb[0].mxu0 %v159
    %v265 = vpop.f32.mrb[0].mxu0
    %v266 = vadd.f32 %v181, %v265
    %v267 = vpop.f32.mrb[0].mxu0
    %v268 = vpop.f32.mrb[0].mxu0
    %v269 = vpop.f32.mrb[0].mxu0
    %270 = vdwg.mxu0
    %271 = vst.msk [vmem:[#allocation2] sm:$0xff] %vm99, %v266
    // Predicated region
    $region30: #{tpu_custom_call.1} parent=1 // pred_check
      _
    $region31: #{tpu_custom_call.1} parent=1 // pred_check_branch
      %273 = sbr.rel (0) target = $region33
    $region32: #{tpu_custom_call.1} parent=1 // pred_region
      %s275 = ssub.s32 128, 128
      %276 = vsyncadd [#allocation3], %s275
      %s278 = sshll.u32 [#allocation2], 4
      %s279 = int_to_ptr.vmem [resolvable:$true] %s278
      %281 = dma.vmem_to_hbm [thread:$0]  %s279, 128, %s7, [#allocation3]
    $region33: #{tpu_custom_call.1} parent=1 // pred_fallthru
      _
    // Predicated region
    $region34: #{tpu_custom_call.1} parent=1 // pred_check
      _
    $region35: #{tpu_custom_call.1} parent=1 // pred_check_branch
      %283 = sbr.rel (0) target = $region37
    $region36: #{tpu_custom_call.1} parent=1 // pred_region
      %284 = dma.done [#allocation3], 128
    $region37: #{tpu_custom_call.1} parent=1 // pred_fallthru
      _
    %285 = vsyncpa [#allocation3], 1

</llo_original>
